<compile_context>
chip_gen: v6e
topology: v6e:2x2x1
jax: 0.10.0
libtpu: 0.0.40
codegen_flags: <defaults>
</compile_context>

<pallas_src>
import jax
import jax.numpy as jnp
from jax import lax
from jax.experimental import pallas as pl
from jax.experimental.pallas import tpu as pltpu

_HIDDEN = (64, 32, 16, 1)


def powernet_kernel(x_ref, w1_ref, b1_ref, w2_ref, b2_ref, w3_ref, b3_ref,
                    w4_ref, b4_ref, o_ref):
    # x_ref: (TB, input_dim) f32, native layout.  Activations flow internally
    # as (features, TB): features on sublanes, batch on the 128-wide lane
    # axis, so the final (1, TB) output is lane-dense.
    x = x_ref[...]

    # fc1 + relu: contract x dim 1 against w1 dim 1 (A @ B^T on the MXU) ->
    # (64, TB).  This folds the layout flip into the matmul instead of a
    # wrapper-side transpose/pad HBM pass.
    h = lax.dot_general(w1_ref[...], x, (((1,), (1,)), ((), ())),
                        preferred_element_type=jnp.float32)
    h = jnp.maximum(h + b1_ref[...], 0.0)

    # fc2 + relu -- f32 activations straight into the dot (no bf16 cast pass).
    h = jnp.dot(w2_ref[...], h, preferred_element_type=jnp.float32)   # (32, TB)
    h = jnp.maximum(h + b2_ref[...], 0.0)

    # fc3 + leaky_relu (PyTorch default slope 0.01) as mul+max.
    h = jnp.dot(w3_ref[...], h, preferred_element_type=jnp.float32)   # (16, TB)
    h = h + b3_ref[...]
    h = jnp.maximum(h, 0.01 * h)

    # fc4: (1,16)@(16,TB) on the idle MXU -> lane-dense (1, TB).
    out = jnp.dot(w4_ref[...], h, preferred_element_type=jnp.float32)
    o_ref[...] = out + b4_ref[0, 0]


def _pick_tile_b(batch, input_dim):
    """Largest batch tile that keeps double-buffered f32 x + f32 intermediates
    comfortably inside a 32 MiB VMEM limit (v7x-safe), clamped to 1024..16384
    to amortize the ~600-cycle per-grid-step overhead."""
    per_col = 2 * 4 * input_dim + 4 * (sum(_HIDDEN) + 2)   # bytes per batch column
    budget = 24 * 1024 * 1024                              # headroom under 32 MiB
    tb = (budget // per_col) // 128 * 128
    tb = int(max(1024, min(16384, tb)))
    if batch <= tb:
        # Single tile for small batches: round up to a sublane multiple only.
        tb = max(8, -(-batch // 8) * 8)
    return tb


def powernet_forward(x, params, *, tile_b=None):
    """x: (B, input_dim) float. params: see init_params. Returns (B, 1) f32."""
    B, input_dim = x.shape
    if tile_b is None:
        tile_b = _pick_tile_b(B, input_dim)
    n_tiles = pl.cdiv(B, tile_b)
    b_pad = n_tiles * tile_b

    x = x.astype(jnp.float32)
    if b_pad != B:
        x = jnp.pad(x, ((0, b_pad - B), (0, 0)))   # zero rows, sliced off below

    w1, b1 = params["w1"], params["b1"]
    w2, b2 = params["w2"], params["b2"]
    w3, b3 = params["w3"], params["b3"]
    w4, b4 = params["w4"], params["b4"]

    def const(shape):   # full-array block, VMEM-resident across all grid steps
        return pl.BlockSpec(shape, lambda i: (0, 0))

    flops = 2 * b_pad * (input_dim * 64 + 64 * 32 + 32 * 16 + 16)
    bytes_accessed = int(x.size) * 4 + b_pad * 4 + sum(
        int(p.size) * 4 for p in params.values())

    out_t = pl.pallas_call(
        powernet_kernel,
        grid=(n_tiles,),
        in_specs=[
            pl.BlockSpec((tile_b, input_dim), lambda i: (i, 0)),   # x batch tile
            const(w1.shape), const(b1.shape),
            const(w2.shape), const(b2.shape),
            const(w3.shape), const(b3.shape),
            const(w4.shape),
            pl.BlockSpec(memory_space=pltpu.MemorySpace.SMEM),     # b4 scalar
        ],
        out_specs=pl.BlockSpec((1, tile_b), lambda i: (0, i)),
        out_shape=jax.ShapeDtypeStruct((1, b_pad), jnp.float32),
        compiler_params=pltpu.CompilerParams(
            dimension_semantics=("parallel",),        # 2 TCs on v7x; no-op v5e/v6e
            vmem_limit_bytes=32 * 1024 * 1024,        # explicit, fits v7x VMEM
        ),
        cost_estimate=pl.CostEstimate(
            flops=flops, transcendentals=0, bytes_accessed=bytes_accessed),
    )(x, w1, b1, w2, b2, w3, b3, w4, b4)

    return out_t[0, :B].reshape(B, 1)


def init_params(key, input_dim):
    """PyTorch-style U(-1/sqrt(fan_in), 1/sqrt(fan_in)) init, (out, in) weight
    layout, f32 throughout.  Biases stored as (out, 1) columns so they
    broadcast over the lane (batch) axis inside the kernel; b4 is the (1, 1)
    SMEM scalar."""
    dims = [(input_dim, 64), (64, 32), (32, 16), (16, 1)]
    params = {}
    for i, (fan_in, fan_out) in enumerate(dims, start=1):
        key, kw, kb = jax.random.split(key, 3)
        bound = 1.0 / (fan_in ** 0.5)
        params[f"w{i}"] = jax.random.uniform(
            kw, (fan_out, fan_in), jnp.float32, -bound, bound)
        params[f"b{i}"] = jax.random.uniform(
            kb, (fan_out, 1), jnp.float32, -bound, bound)
    return params


def powernet_reference(x, params):
    """Plain-JAX f32 reference mirroring the PyTorch forward pass."""
    with jax.default_matmul_precision("float32"):
        x = x.astype(jnp.float32)
        h = jnp.maximum(x @ params["w1"].T + params["b1"].T, 0.0)
        h = jnp.maximum(h @ params["w2"].T + params["b2"].T, 0.0)
        h = h @ params["w3"].T + params["b3"].T
        h = jnp.where(h > 0.0, h, 0.01 * h)
        return h @ params["w4"].T + params["b4"].T


if __name__ == "__main__":
    key = jax.random.PRNGKey(0)
    key, kx, kp, kx2 = jax.random.split(key, 4)

    batch, input_dim = 8, 8
    x = jax.random.normal(kx, (batch, input_dim), jnp.float32)
    params = init_params(kp, input_dim)

    out = jax.block_until_ready(powernet_forward(x, params))
    ref = powernet_reference(x, params)
    assert out.shape == (batch, 1)
    # MXU f32 matmul pass decomposition may differ slightly from the XLA ref.
    assert jnp.allclose(out, ref, atol=1e-2, rtol=1e-2), float(
        jnp.max(jnp.abs(out - ref)))

    # Exercise the multi-tile + padded-tail path (grid of 3, small shapes).
    batch2 = 300
    x2 = jax.random.normal(kx2, (batch2, input_dim), jnp.float32)
    out2 = jax.block_until_ready(powernet_forward(x2, params, tile_b=128))
    ref2 = powernet_reference(x2, params)
    assert out2.shape == (batch2, 1)
    assert jnp.allclose(out2, ref2, atol=1e-2, rtol=1e-2), float(
        jnp.max(jnp.abs(out2 - ref2)))

    print("KERNEL_OK")
</pallas_src>

<mosaic_0001>
module attributes {stable_mosaic.version = 11 : i64} {
  func.func @powernet_kernel(%arg0: i32, %arg1: memref<8x8xf32, #tpu.memory_space<vmem>>, %arg2: memref<64x8xf32, #tpu.memory_space<vmem>>, %arg3: memref<64x1xf32, #tpu.memory_space<vmem>>, %arg4: memref<32x64xf32, #tpu.memory_space<vmem>>, %arg5: memref<32x1xf32, #tpu.memory_space<vmem>>, %arg6: memref<16x32xf32, #tpu.memory_space<vmem>>, %arg7: memref<16x1xf32, #tpu.memory_space<vmem>>, %arg8: memref<1x16xf32, #tpu.memory_space<vmem>>, %arg9: memref<1x1xf32, #tpu.memory_space<smem>>, %arg10: memref<1x8xf32, #tpu.memory_space<vmem>>) attributes {dimension_semantics = [#tpu.dimension_semantics<parallel>], iteration_bounds = array<i64: 1>, scalar_prefetch = 0 : i64, scratch_operands = 0 : i64, tpu.core_type = #tpu.core_type<tc>, window_params = [{transform_indices = @transform_0, window_bounds = array<i64: 8, 8>}, {pipeline_mode = #tpu.pipeline_mode<synchronous>, transform_indices = @transform_1, window_bounds = array<i64: 64, 8>}, {pipeline_mode = #tpu.pipeline_mode<synchronous>, transform_indices = @transform_2, window_bounds = array<i64: 64, 1>}, {pipeline_mode = #tpu.pipeline_mode<synchronous>, transform_indices = @transform_3, window_bounds = array<i64: 32, 64>}, {pipeline_mode = #tpu.pipeline_mode<synchronous>, transform_indices = @transform_4, window_bounds = array<i64: 32, 1>}, {pipeline_mode = #tpu.pipeline_mode<synchronous>, transform_indices = @transform_5, window_bounds = array<i64: 16, 32>}, {pipeline_mode = #tpu.pipeline_mode<synchronous>, transform_indices = @transform_6, window_bounds = array<i64: 16, 1>}, {pipeline_mode = #tpu.pipeline_mode<synchronous>, transform_indices = @transform_7, window_bounds = array<i64: 1, 16>}, {transform_indices = @transform_8, window_bounds = array<i64: 1, 1>}, {transform_indices = @transform_9, window_bounds = array<i64: 1, 8>}]} {
    %c0 = arith.constant 0 : index
    %c0_0 = arith.constant 0 : index
    %0 = vector.load %arg1[%c0, %c0_0] : memref<8x8xf32, #tpu.memory_space<vmem>>, vector<8x8xf32>
    %c0_1 = arith.constant 0 : index
    %c0_2 = arith.constant 0 : index
    %1 = vector.load %arg2[%c0_1, %c0_2] : memref<64x8xf32, #tpu.memory_space<vmem>>, vector<64x8xf32>
    %cst = arith.constant dense<0.000000e+00> : vector<64x8xf32>
    %2 = tpu.matmul %1, %0, %cst {dimension_numbers = #tpu.dot_dimension_numbers<[1], [1], [0], [0], [0, 0, 1, 0], [], []>} : vector<64x8xf32>, vector<8x8xf32>, vector<64x8xf32> -> vector<64x8xf32>
    %c0_3 = arith.constant 0 : index
    %c0_4 = arith.constant 0 : index
    %3 = vector.load %arg3[%c0_3, %c0_4] : memref<64x1xf32, #tpu.memory_space<vmem>>, vector<64x1xf32>
    %4 = vector.broadcast %3 : vector<64x1xf32> to vector<64x8xf32>
    %5 = arith.addf %2, %4 : vector<64x8xf32>
    %cst_5 = arith.constant 0.000000e+00 : f32
    %6 = vector.broadcast %cst_5 : f32 to vector<64x8xf32>
    %7 = arith.maximumf %5, %6 : vector<64x8xf32>
    %c0_6 = arith.constant 0 : index
    %c0_7 = arith.constant 0 : index
    %8 = vector.load %arg4[%c0_6, %c0_7] : memref<32x64xf32, #tpu.memory_space<vmem>>, vector<32x64xf32>
    %cst_8 = arith.constant dense<0.000000e+00> : vector<32x8xf32>
    %9 = tpu.matmul %8, %7, %cst_8 {dimension_numbers = #tpu.dot_dimension_numbers<[1], [0], [0], [1], [0, 0, 1, 1], [], []>} : vector<32x64xf32>, vector<64x8xf32>, vector<32x8xf32> -> vector<32x8xf32>
    %c0_9 = arith.constant 0 : index
    %c0_10 = arith.constant 0 : index
    %10 = vector.load %arg5[%c0_9, %c0_10] : memref<32x1xf32, #tpu.memory_space<vmem>>, vector<32x1xf32>
    %11 = vector.broadcast %10 : vector<32x1xf32> to vector<32x8xf32>
    %12 = arith.addf %9, %11 : vector<32x8xf32>
    %cst_11 = arith.constant 0.000000e+00 : f32
    %13 = vector.broadcast %cst_11 : f32 to vector<32x8xf32>
    %14 = arith.maximumf %12, %13 : vector<32x8xf32>
    %c0_12 = arith.constant 0 : index
    %c0_13 = arith.constant 0 : index
    %15 = vector.load %arg6[%c0_12, %c0_13] : memref<16x32xf32, #tpu.memory_space<vmem>>, vector<16x32xf32>
    %cst_14 = arith.constant dense<0.000000e+00> : vector<16x8xf32>
    %16 = tpu.matmul %15, %14, %cst_14 {dimension_numbers = #tpu.dot_dimension_numbers<[1], [0], [0], [1], [0, 0, 1, 1], [], []>} : vector<16x32xf32>, vector<32x8xf32>, vector<16x8xf32> -> vector<16x8xf32>
    %c0_15 = arith.constant 0 : index
    %c0_16 = arith.constant 0 : index
    %17 = vector.load %arg7[%c0_15, %c0_16] : memref<16x1xf32, #tpu.memory_space<vmem>>, vector<16x1xf32>
    %18 = vector.broadcast %17 : vector<16x1xf32> to vector<16x8xf32>
    %19 = arith.addf %16, %18 : vector<16x8xf32>
    %cst_17 = arith.constant 0.00999999977 : f32
    %20 = vector.broadcast %cst_17 : f32 to vector<16x8xf32>
    %21 = arith.mulf %20, %19 : vector<16x8xf32>
    %22 = arith.maximumf %19, %21 : vector<16x8xf32>
    %c0_18 = arith.constant 0 : index
    %c0_19 = arith.constant 0 : index
    %23 = vector.load %arg8[%c0_18, %c0_19] : memref<1x16xf32, #tpu.memory_space<vmem>>, vector<1x16xf32>
    %cst_20 = arith.constant dense<0.000000e+00> : vector<1x8xf32>
    %24 = tpu.matmul %23, %22, %cst_20 {dimension_numbers = #tpu.dot_dimension_numbers<[1], [0], [0], [1], [0, 0, 1, 1], [], []>} : vector<1x16xf32>, vector<16x8xf32>, vector<1x8xf32> -> vector<1x8xf32>
    %c0_21 = arith.constant 0 : index
    %c0_22 = arith.constant 0 : index
    %25 = memref.load %arg9[%c0_21, %c0_22] : memref<1x1xf32, #tpu.memory_space<smem>>
    %26 = vector.broadcast %25 : f32 to vector<1x8xf32>
    %27 = arith.addf %24, %26 : vector<1x8xf32>
    %c0_23 = arith.constant 0 : index
    %c0_24 = arith.constant 0 : index
    %28 = vector.load %arg10[%c0_23, %c0_24] : memref<1x8xf32, #tpu.memory_space<vmem>>, vector<1x8xf32>
    tpu.vector_store %arg10[%c0_23, %c0_24], %27 {strides = array<i32>} : memref<1x8xf32, #tpu.memory_space<vmem>>, vector<1x8xf32>,
    return
  }
  func.func @transform_0(%arg0: i32) -> (i32, i32) {
    %c0_i32 = arith.constant 0 : i32
    %c0_i32_0 = arith.constant 0 : i32
    return %arg0, %c0_i32 : i32, i32
  }
  func.func @transform_1(%arg0: i32) -> (i32, i32) {
    %c0_i32 = arith.constant 0 : i32
    %c0_i32_0 = arith.constant 0 : i32
    %c0_i32_1 = arith.constant 0 : i32
    return %c0_i32, %c0_i32_0 : i32, i32
  }
  func.func @transform_2(%arg0: i32) -> (i32, i32) {
    %c0_i32 = arith.constant 0 : i32
    %c0_i32_0 = arith.constant 0 : i32
    %c0_i32_1 = arith.constant 0 : i32
    return %c0_i32, %c0_i32_0 : i32, i32
  }
  func.func @transform_3(%arg0: i32) -> (i32, i32) {
    %c0_i32 = arith.constant 0 : i32
    %c0_i32_0 = arith.constant 0 : i32
    %c0_i32_1 = arith.constant 0 : i32
    return %c0_i32, %c0_i32_0 : i32, i32
  }
  func.func @transform_4(%arg0: i32) -> (i32, i32) {
    %c0_i32 = arith.constant 0 : i32
    %c0_i32_0 = arith.constant 0 : i32
    %c0_i32_1 = arith.constant 0 : i32
    return %c0_i32, %c0_i32_0 : i32, i32
  }
  func.func @transform_5(%arg0: i32) -> (i32, i32) {
    %c0_i32 = arith.constant 0 : i32
    %c0_i32_0 = arith.constant 0 : i32
    %c0_i32_1 = arith.constant 0 : i32
    return %c0_i32, %c0_i32_0 : i32, i32
  }
  func.func @transform_6(%arg0: i32) -> (i32, i32) {
    %c0_i32 = arith.constant 0 : i32
    %c0_i32_0 = arith.constant 0 : i32
    %c0_i32_1 = arith.constant 0 : i32
    return %c0_i32, %c0_i32_0 : i32, i32
  }
  func.func @transform_7(%arg0: i32) -> (i32, i32) {
    %c0_i32 = arith.constant 0 : i32
    %c0_i32_0 = arith.constant 0 : i32
    %c0_i32_1 = arith.constant 0 : i32
    return %c0_i32, %c0_i32_0 : i32, i32
  }
  func.func @transform_8(%arg0: i32) -> (i32, i32) {
    %c0_i32 = arith.constant 0 : i32
    %c0_i32_0 = arith.constant 0 : i32
    %c0_i32_1 = arith.constant 0 : i32
    return %c0_i32, %c0_i32_0 : i32, i32
  }
  func.func @transform_9(%arg0: i32) -> (i32, i32) {
    %c0_i32 = arith.constant 0 : i32
    %c0_i32_0 = arith.constant 0 : i32
    return %c0_i32, %arg0 : i32, i32
  }
}

</mosaic_0001>

<llo_original>
// kernel: tpu_custom_call.1
$region0: #{tpu_custom_call.1}
  #allocation0 [shape = 'u32[]', space=smem, size = 0x4, offset = 0x4, fixed_abs, tag = 'smem constant byte address 0x4 - core index']
  #allocation1 [shape = 'u32[144,128]{1,0:T(1,128)}', space=vmem, size = 0x12000, scoped, tag = 'internal scratch']
  #allocation2 [shape = 'f32[1,1]{1,0:T(1,128)S(6)}', space=smem, size = 0x200, scoped, tag = 'scoped memory for tpu_custom_call.1']
  %s0 = inlined_call_operand.vmem [shape: f32[8,8], index: 0, kind: input, shape index: {}]
  %s1 = inlined_call_operand.vmem [shape: f32[64,8], index: 1, kind: input, shape index: {}]
  %s2 = inlined_call_operand.vmem [shape: f32[64,1], index: 2, kind: input, shape index: {}]
  %s3 = inlined_call_operand.vmem [shape: f32[32,64], index: 3, kind: input, shape index: {}]
  %s4 = inlined_call_operand.vmem [shape: f32[32,1], index: 4, kind: input, shape index: {}]
  %s5 = inlined_call_operand.vmem [shape: f32[16,32], index: 5, kind: input, shape index: {}]
  %s6 = inlined_call_operand.vmem [shape: f32[16,1], index: 6, kind: input, shape index: {}]
  %s7 = inlined_call_operand.vmem [shape: f32[1,16], index: 7, kind: input, shape index: {}]
  %s8 = inlined_call_operand.<no memory space> [shape: f32[1,1], index: 8, kind: input, shape index: {}]
  %s9 = inlined_call_operand.hbm [shape: f32[1,8], index: 9, kind: output, shape index: {}]
  %s10 = sld [smem:[#allocation0]]
  $region46: #{tpu_custom_call.1} parent=0
    _
  %s12 = ssub.s32 1, %s10
  %s13 = scalar_select 0, %s12, %s10
  %14 = sst [smem:[#allocation2]] %s8
  $region1: #{tpu_custom_call.1} parent=0
    #allocation3 [shape = 'u8[512]{0}', space=vmem, size = 0x400, scoped, tag = 'output window, operand 0, single buffered']
    #allocation4 [shape = 's32[1]{0}', space=sflag, size = 0x4, scoped, tag = 'scoped memory for tpu_custom_call.1']
    %15 = vsyncpa [#allocation4], 0
    // Predicated region
    $region2: #{tpu_custom_call.1} parent=1 // pred_check
      _
    $region3: #{tpu_custom_call.1} parent=1 // pred_check_branch
      %17 = sbr.rel (0) target = $region5
    $region4: #{tpu_custom_call.1} parent=1 // pred_region
      _
    $region5: #{tpu_custom_call.1} parent=1 // pred_fallthru
      _
    // Predicated region
    $region6: #{tpu_custom_call.1} parent=1 // pred_check
      _
    $region7: #{tpu_custom_call.1} parent=1 // pred_check_branch
      %19 = sbr.rel (0) target = $region9
    $region8: #{tpu_custom_call.1} parent=1 // pred_region
      _
    $region9: #{tpu_custom_call.1} parent=1 // pred_fallthru
      _
    // Predicated region
    $region10: #{tpu_custom_call.1} parent=1 // pred_check
      _
    $region11: #{tpu_custom_call.1} parent=1 // pred_check_branch
      %21 = sbr.rel (0) target = $region13
    $region12: #{tpu_custom_call.1} parent=1 // pred_region
      _
    $region13: #{tpu_custom_call.1} parent=1 // pred_fallthru
      _
    // Predicated region
    $region14: #{tpu_custom_call.1} parent=1 // pred_check
      _
    $region15: #{tpu_custom_call.1} parent=1 // pred_check_branch
      %23 = sbr.rel (0) target = $region17
    $region16: #{tpu_custom_call.1} parent=1 // pred_region
      _
    $region17: #{tpu_custom_call.1} parent=1 // pred_fallthru
      _
    // Predicated region
    $region18: #{tpu_custom_call.1} parent=1 // pred_check
      _
    $region19: #{tpu_custom_call.1} parent=1 // pred_check_branch
      %25 = sbr.rel (0) target = $region21
    $region20: #{tpu_custom_call.1} parent=1 // pred_region
      _
    $region21: #{tpu_custom_call.1} parent=1 // pred_fallthru
      _
    // Predicated region
    $region22: #{tpu_custom_call.1} parent=1 // pred_check
      _
    $region23: #{tpu_custom_call.1} parent=1 // pred_check_branch
      %27 = sbr.rel (0) target = $region25
    $region24: #{tpu_custom_call.1} parent=1 // pred_region
      _
    $region25: #{tpu_custom_call.1} parent=1 // pred_fallthru
      _
    // Predicated region
    $region26: #{tpu_custom_call.1} parent=1 // pred_check
      _
    $region27: #{tpu_custom_call.1} parent=1 // pred_check_branch
      %29 = sbr.rel (0) target = $region29
    $region28: #{tpu_custom_call.1} parent=1 // pred_region
      _
    $region29: #{tpu_custom_call.1} parent=1 // pred_fallthru
      _
    // Predicated region
    $region30: #{tpu_custom_call.1} parent=1 // pred_check
      _
    $region31: #{tpu_custom_call.1} parent=1 // pred_check_branch
      %31 = sbr.rel (0) target = $region33
    $region32: #{tpu_custom_call.1} parent=1 // pred_region
      _
    $region33: #{tpu_custom_call.1} parent=1 // pred_fallthru
      _
    // Predicated region
    $region34: #{tpu_custom_call.1} parent=1 // pred_check
      _
    $region35: #{tpu_custom_call.1} parent=1 // pred_check_branch
      %33 = sbr.rel (0) target = $region37
    $region36: #{tpu_custom_call.1} parent=1 // pred_region
      _
    $region37: #{tpu_custom_call.1} parent=1 // pred_fallthru
      _
    %v34 = vld [vmem:[%s0] sm:$0xff]
    %v35 = vld [vmem:[%s1] sm:$0xff]
    %v36 = vld [vmem:[%s1 + $0x8] sm:$0xff]
    %v37 = vld [vmem:[%s1 + $0x10] sm:$0xff]
    %v38 = vld [vmem:[%s1 + $0x18] sm:$0xff]
    %v39 = vld [vmem:[%s1 + $0x20] sm:$0xff]
    %v40 = vld [vmem:[%s1 + $0x28] sm:$0xff]
    %v41 = vld [vmem:[%s1 + $0x30] sm:$0xff]
    %v42 = vld [vmem:[%s1 + $0x38] sm:$0xff]
    %v43 = vld [vmem:[%s2] sm:$0xff]
    %v44 = vld [vmem:[%s2 + $0x8] sm:$0xff]
    %v45 = vld [vmem:[%s2 + $0x10] sm:$0xff]
    %v46 = vld [vmem:[%s2 + $0x18] sm:$0xff]
    %v47 = vld [vmem:[%s2 + $0x20] sm:$0xff]
    %v48 = vld [vmem:[%s2 + $0x28] sm:$0xff]
    %v49 = vld [vmem:[%s2 + $0x30] sm:$0xff]
    %v50 = vld [vmem:[%s2 + $0x38] sm:$0xff]
    %52 = vset.pattern.permute.xlu0 0
    %53 = vperm.xlu0 %52, %v43
    %v54 = vpop.permute.xlu0 %53
    %57 = vset.pattern.permute.xlu0 0
    %58 = vperm.xlu0 %57, %v44
    %v59 = vpop.permute.xlu0 %58
    %62 = vset.pattern.permute.xlu0 0
    %63 = vperm.xlu0 %62, %v45
    %v64 = vpop.permute.xlu0 %63
    %67 = vset.pattern.permute.xlu0 0
    %68 = vperm.xlu0 %67, %v46
    %v69 = vpop.permute.xlu0 %68
    %72 = vset.pattern.permute.xlu0 0
    %73 = vperm.xlu0 %72, %v47
    %v74 = vpop.permute.xlu0 %73
    %77 = vset.pattern.permute.xlu0 0
    %78 = vperm.xlu0 %77, %v48
    %v79 = vpop.permute.xlu0 %78
    %82 = vset.pattern.permute.xlu0 0
    %83 = vperm.xlu0 %82, %v49
    %v84 = vpop.permute.xlu0 %83
    %87 = vset.pattern.permute.xlu0 0
    %88 = vperm.xlu0 %87, %v50
    %v89 = vpop.permute.xlu0 %88
    %vm91 = vcmask 64512
    %v93 = vsel %vm91, %v35, 0
    %v96 = vsel %vm91, %v36, 0
    %v99 = vsel %vm91, %v37, 0
    %v102 = vsel %vm91, %v38, 0
    %v105 = vsel %vm91, %v39, 0
    %v108 = vsel %vm91, %v40, 0
    %v111 = vsel %vm91, %v41, 0
    %v114 = vsel %vm91, %v42, 0
    %v117 = vsel %vm91, %v34, 0
    %119 = vmatprep.subr.mxu0 0.0
    %120 = vmatpush1.xpose.msra.mxu0 0.0
    %121 = vmatprep.subr.mxu0 0.0
    %122 = vmatpush1.xpose.msra.mxu0 0.0
    %123 = vmatprep.subr.mxu0 0.0
    %124 = vmatpush1.xpose.msra.mxu0 0.0
    %125 = vmatprep.subr.mxu0 0.0
    %126 = vmatpush1.xpose.msra.mxu0 0.0
    %127 = vmatprep.subr.mxu0 0.0
    %128 = vmatpush1.xpose.msra.mxu0 0.0
    %129 = vmatprep.subr.mxu0 0.0
    %130 = vmatpush1.xpose.msra.mxu0 0.0
    %131 = vmatprep.subr.mxu0 0.0
    %132 = vmatpush1.xpose.msra.mxu0 0.0
    %133 = vmatprep.subr.mxu0 0.0
    %134 = vmatpush1.xpose.msra.mxu0 0.0
    %135 = vmatprep.subr.mxu0 0.0
    %136 = vmatpush1.xpose.msra.mxu0 0.0
    %137 = vmatprep.subr.mxu0 0.0
    %138 = vmatpush1.xpose.msra.mxu0 0.0
    %139 = vmatprep.subr.mxu0 0.0
    %140 = vmatpush1.xpose.msra.mxu0 0.0
    %141 = vmatprep.subr.mxu0 0.0
    %142 = vmatpush1.xpose.msra.mxu0 0.0
    %143 = vmatprep.subr.mxu0 0.0
    %144 = vmatpush1.xpose.msra.mxu0 0.0
    %145 = vmatprep.subr.mxu0 0.0
    %146 = vmatpush1.xpose.msra.mxu0 0.0
    %147 = vmatprep.subr.mxu0 0.0
    %148 = vmatpush1.xpose.msra.mxu0 0.0
    %149 = vmatprep.subr.mxu0 0.0
    %150 = vmatpush1.xpose.msra.mxu0 %v117
    %151 = vmatprep.subr.mxu0 0.0
    %152 = vmatpush2.xpose.msra.mxu0 0.0
    %153 = vmatprep.subr.mxu0 0.0
    %154 = vmatpush2.xpose.msra.mxu0 0.0
    %155 = vmatprep.subr.mxu0 0.0
    %156 = vmatpush2.xpose.msra.mxu0 0.0
    %157 = vmatprep.subr.mxu0 0.0
    %158 = vmatpush2.xpose.msra.mxu0 0.0
    %159 = vmatprep.subr.mxu0 0.0
    %160 = vmatpush2.xpose.msra.mxu0 0.0
    %161 = vmatprep.subr.mxu0 0.0
    %162 = vmatpush2.xpose.msra.mxu0 0.0
    %163 = vmatprep.subr.mxu0 0.0
    %164 = vmatpush2.xpose.msra.mxu0 0.0
    %165 = vmatprep.subr.mxu0 0.0
    %166 = vmatpush2.xpose.msra.mxu0 0.0
    %167 = vmatprep.subr.mxu0 0.0
    %168 = vmatpush2.xpose.msra.mxu0 0.0
    %169 = vmatprep.subr.mxu0 0.0
    %170 = vmatpush2.xpose.msra.mxu0 0.0
    %171 = vmatprep.subr.mxu0 0.0
    %172 = vmatpush2.xpose.msra.mxu0 0.0
    %173 = vmatprep.subr.mxu0 0.0
    %174 = vmatpush2.xpose.msra.mxu0 0.0
    %175 = vmatprep.subr.mxu0 0.0
    %176 = vmatpush2.xpose.msra.mxu0 0.0
    %177 = vmatprep.subr.mxu0 0.0
    %178 = vmatpush2.xpose.msra.mxu0 0.0
    %179 = vmatprep.subr.mxu0 0.0
    %180 = vmatpush2.xpose.msra.mxu0 0.0
    %181 = vmatprep.subr.mxu0 0.0
    %182 = vmatpush2.xpose.msra.mxu0 0.0
    %183 = vmatprep.mubr.f32.mxu0 0.0
    %184 = vmatmul.mubr.f32.gmra.mxu0 %v93
    %v185 = vpop.f32.mrf.mxu0
    %v186 = vadd.f32 %v54, %v185
    %v187 = vpop.f32.mrf.mxu0
    %188 = vmatprep.mubr.f32.mxu0 0.0
    %189 = vmatmul.mubr.f32.gmra.mxu0 %v96
    %v190 = vpop.f32.mrf.mxu0
    %v191 = vadd.f32 %v59, %v190
    %v192 = vpop.f32.mrf.mxu0
    %193 = vmatprep.mubr.f32.mxu0 0.0
    %194 = vmatmul.mubr.f32.gmra.mxu0 %v99
    %v195 = vpop.f32.mrf.mxu0
    %v196 = vadd.f32 %v64, %v195
    %v197 = vpop.f32.mrf.mxu0
    %198 = vmatprep.mubr.f32.mxu0 0.0
    %199 = vmatmul.mubr.f32.gmra.mxu0 %v102
    %v200 = vpop.f32.mrf.mxu0
    %v201 = vadd.f32 %v69, %v200
    %v202 = vpop.f32.mrf.mxu0
    %203 = vmatprep.mubr.f32.mxu0 0.0
    %204 = vmatmul.mubr.f32.gmra.mxu0 %v105
    %v205 = vpop.f32.mrf.mxu0
    %v206 = vadd.f32 %v74, %v205
    %v207 = vpop.f32.mrf.mxu0
    %208 = vmatprep.mubr.f32.mxu0 0.0
    %209 = vmatmul.mubr.f32.gmra.mxu0 %v108
    %v210 = vpop.f32.mrf.mxu0
    %v211 = vadd.f32 %v79, %v210
    %v212 = vpop.f32.mrf.mxu0
    %213 = vmatprep.mubr.f32.mxu0 0.0
    %214 = vmatmul.mubr.f32.gmra.mxu0 %v111
    %v215 = vpop.f32.mrf.mxu0
    %v216 = vadd.f32 %v84, %v215
    %v217 = vpop.f32.mrf.mxu0
    %218 = vmatprep.mubr.f32.mxu0 0.0
    %219 = vmatmul.mubr.f32.gmra.mxu0 %v114
    %v220 = vpop.f32.mrf.mxu0
    %v221 = vadd.f32 %v89, %v220
    %v222 = vpop.f32.mrf.mxu0
    %223 = vdwg.mxu0
    %v224 = vmax.f32 %v186, 0.0
    %v225 = vmax.f32 %v191, 0.0
    %v226 = vmax.f32 %v196, 0.0
    %v227 = vmax.f32 %v201, 0.0
    %v228 = vmax.f32 %v206, 0.0
    %v229 = vmax.f32 %v211, 0.0
    %v230 = vmax.f32 %v216, 0.0
    %v231 = vmax.f32 %v221, 0.0
    %v232 = vld [vmem:[%s3] sm:$0xff]
    %v233 = vld [vmem:[%s3 + $0x8] sm:$0xff]
    %v234 = vld [vmem:[%s3 + $0x10] sm:$0xff]
    %v235 = vld [vmem:[%s3 + $0x18] sm:$0xff]
    %v236 = vld [vmem:[%s4] sm:$0xff]
    %v237 = vld [vmem:[%s4 + $0x8] sm:$0xff]
    %v238 = vld [vmem:[%s4 + $0x10] sm:$0xff]
    %v239 = vld [vmem:[%s4 + $0x18] sm:$0xff]
    %241 = vset.pattern.permute.xlu0 0
    %242 = vperm.xlu0 %241, %v236
    %v243 = vpop.permute.xlu0 %242
    %246 = vset.pattern.permute.xlu0 0
    %247 = vperm.xlu0 %246, %v237
    %v248 = vpop.permute.xlu0 %247
    %251 = vset.pattern.permute.xlu0 0
    %252 = vperm.xlu0 %251, %v238
    %v253 = vpop.permute.xlu0 %252
    %256 = vset.pattern.permute.xlu0 0
    %257 = vperm.xlu0 %256, %v239
    %v258 = vpop.permute.xlu0 %257
    %vm260 = vcmask 523264
    %v262 = vsel %vm260, %v232, 0
    %v265 = vsel %vm260, %v233, 0
    %v268 = vsel %vm260, %v234, 0
    %v271 = vsel %vm260, %v235, 0
    %273 = vmatprep.subr.mxu0 0.0
    %274 = vmatpush1.msra.mxu0 0.0
    %275 = vmatprep.subr.mxu0 0.0
    %276 = vmatpush1.msra.mxu0 0.0
    %277 = vmatprep.subr.mxu0 0.0
    %278 = vmatpush1.msra.mxu0 0.0
    %279 = vmatprep.subr.mxu0 0.0
    %280 = vmatpush1.msra.mxu0 0.0
    %281 = vmatprep.subr.mxu0 0.0
    %282 = vmatpush1.msra.mxu0 0.0
    %283 = vmatprep.subr.mxu0 0.0
    %284 = vmatpush1.msra.mxu0 0.0
    %285 = vmatprep.subr.mxu0 0.0
    %286 = vmatpush1.msra.mxu0 0.0
    %287 = vmatprep.subr.mxu0 0.0
    %288 = vmatpush1.msra.mxu0 0.0
    %289 = vmatprep.subr.mxu0 0.0
    %290 = vmatpush1.msra.mxu0 %v231
    %291 = vmatprep.subr.mxu0 0.0
    %292 = vmatpush1.msra.mxu0 %v230
    %293 = vmatprep.subr.mxu0 0.0
    %294 = vmatpush1.msra.mxu0 %v229
    %295 = vmatprep.subr.mxu0 0.0
    %296 = vmatpush1.msra.mxu0 %v228
    %297 = vmatprep.subr.mxu0 0.0
    %298 = vmatpush1.msra.mxu0 %v227
    %299 = vmatprep.subr.mxu0 0.0
    %300 = vmatpush1.msra.mxu0 %v226
    %301 = vmatprep.subr.mxu0 0.0
    %302 = vmatpush1.msra.mxu0 %v225
    %303 = vmatprep.subr.mxu0 0.0
    %304 = vmatpush1.msra.mxu0 %v224
    %305 = vmatprep.subr.mxu0 0.0
    %306 = vmatpush2.msra.mxu0 0.0
    %307 = vmatprep.subr.mxu0 0.0
    %308 = vmatpush2.msra.mxu0 0.0
    %309 = vmatprep.subr.mxu0 0.0
    %310 = vmatpush2.msra.mxu0 0.0
    %311 = vmatprep.subr.mxu0 0.0
    %312 = vmatpush2.msra.mxu0 0.0
    %313 = vmatprep.subr.mxu0 0.0
    %314 = vmatpush2.msra.mxu0 0.0
    %315 = vmatprep.subr.mxu0 0.0
    %316 = vmatpush2.msra.mxu0 0.0
    %317 = vmatprep.subr.mxu0 0.0
    %318 = vmatpush2.msra.mxu0 0.0
    %319 = vmatprep.subr.mxu0 0.0
    %320 = vmatpush2.msra.mxu0 0.0
    %321 = vmatprep.subr.mxu0 0.0
    %322 = vmatpush2.msra.mxu0 0.0
    %323 = vmatprep.subr.mxu0 0.0
    %324 = vmatpush2.msra.mxu0 0.0
    %325 = vmatprep.subr.mxu0 0.0
    %326 = vmatpush2.msra.mxu0 0.0
    %327 = vmatprep.subr.mxu0 0.0
    %328 = vmatpush2.msra.mxu0 0.0
    %329 = vmatprep.subr.mxu0 0.0
    %330 = vmatpush2.msra.mxu0 0.0
    %331 = vmatprep.subr.mxu0 0.0
    %332 = vmatpush2.msra.mxu0 0.0
    %333 = vmatprep.subr.mxu0 0.0
    %334 = vmatpush2.msra.mxu0 0.0
    %335 = vmatprep.subr.mxu0 0.0
    %336 = vmatpush2.msra.mxu0 0.0
    %337 = vmatprep.mubr.f32.mxu0 0.0
    %338 = vmatmul.mubr.f32.gmra.mxu0 %v262
    %v339 = vpop.f32.mrf.mxu0
    %v340 = vadd.f32 %v243, %v339
    %v341 = vpop.f32.mrf.mxu0
    %342 = vmatprep.mubr.f32.mxu0 0.0
    %343 = vmatmul.mubr.f32.gmra.mxu0 %v265
    %v344 = vpop.f32.mrf.mxu0
    %v345 = vadd.f32 %v248, %v344
    %v346 = vpop.f32.mrf.mxu0
    %347 = vmatprep.mubr.f32.mxu0 0.0
    %348 = vmatmul.mubr.f32.gmra.mxu0 %v268
    %v349 = vpop.f32.mrf.mxu0
    %v350 = vadd.f32 %v253, %v349
    %v351 = vpop.f32.mrf.mxu0
    %352 = vmatprep.mubr.f32.mxu0 0.0
    %353 = vmatmul.mubr.f32.gmra.mxu0 %v271
    %v354 = vpop.f32.mrf.mxu0
    %v355 = vadd.f32 %v258, %v354
    %v356 = vpop.f32.mrf.mxu0
    %357 = vdwg.mxu0
    %v358 = vmax.f32 %v340, 0.0
    %v359 = vmax.f32 %v345, 0.0
    %v360 = vmax.f32 %v350, 0.0
    %v361 = vmax.f32 %v355, 0.0
    %v362 = vld [vmem:[%s5] sm:$0xff]
    %v363 = vld [vmem:[%s5 + $0x8] sm:$0xff]
    %v364 = vld [vmem:[%s6] sm:$0xff]
    %v365 = vld [vmem:[%s6 + $0x8] sm:$0xff]
    %367 = vset.pattern.permute.xlu0 0
    %368 = vperm.xlu0 %367, %v364
    %v369 = vpop.permute.xlu0 %368
    %372 = vset.pattern.permute.xlu0 0
    %373 = vperm.xlu0 %372, %v365
    %v374 = vpop.permute.xlu0 %373
    %vm376 = vcmask 261120
    %v378 = vsel %vm376, %v362, 0
    %v381 = vsel %vm376, %v363, 0
    %383 = vmatprep.subr.mxu0 0.0
    %384 = vmatpush1.msra.mxu0 0.0
    %385 = vmatprep.subr.mxu0 0.0
    %386 = vmatpush1.msra.mxu0 0.0
    %387 = vmatprep.subr.mxu0 0.0
    %388 = vmatpush1.msra.mxu0 0.0
    %389 = vmatprep.subr.mxu0 0.0
    %390 = vmatpush1.msra.mxu0 0.0
    %391 = vmatprep.subr.mxu0 0.0
    %392 = vmatpush1.msra.mxu0 0.0
    %393 = vmatprep.subr.mxu0 0.0
    %394 = vmatpush1.msra.mxu0 0.0
    %395 = vmatprep.subr.mxu0 0.0
    %396 = vmatpush1.msra.mxu0 0.0
    %397 = vmatprep.subr.mxu0 0.0
    %398 = vmatpush1.msra.mxu0 0.0
    %399 = vmatprep.subr.mxu0 0.0
    %400 = vmatpush1.msra.mxu0 0.0
    %401 = vmatprep.subr.mxu0 0.0
    %402 = vmatpush1.msra.mxu0 0.0
    %403 = vmatprep.subr.mxu0 0.0
    %404 = vmatpush1.msra.mxu0 0.0
    %405 = vmatprep.subr.mxu0 0.0
    %406 = vmatpush1.msra.mxu0 0.0
    %407 = vmatprep.subr.mxu0 0.0
    %408 = vmatpush1.msra.mxu0 %v361
    %409 = vmatprep.subr.mxu0 0.0
    %410 = vmatpush1.msra.mxu0 %v360
    %411 = vmatprep.subr.mxu0 0.0
    %412 = vmatpush1.msra.mxu0 %v359
    %413 = vmatprep.subr.mxu0 0.0
    %414 = vmatpush1.msra.mxu0 %v358
    %415 = vmatprep.subr.mxu0 0.0
    %416 = vmatpush2.msra.mxu0 0.0
    %417 = vmatprep.subr.mxu0 0.0
    %418 = vmatpush2.msra.mxu0 0.0
    %419 = vmatprep.subr.mxu0 0.0
    %420 = vmatpush2.msra.mxu0 0.0
    %421 = vmatprep.subr.mxu0 0.0
    %422 = vmatpush2.msra.mxu0 0.0
    %423 = vmatprep.subr.mxu0 0.0
    %424 = vmatpush2.msra.mxu0 0.0
    %425 = vmatprep.subr.mxu0 0.0
    %426 = vmatpush2.msra.mxu0 0.0
    %427 = vmatprep.subr.mxu0 0.0
    %428 = vmatpush2.msra.mxu0 0.0
    %429 = vmatprep.subr.mxu0 0.0
    %430 = vmatpush2.msra.mxu0 0.0
    %431 = vmatprep.subr.mxu0 0.0
    %432 = vmatpush2.msra.mxu0 0.0
    %433 = vmatprep.subr.mxu0 0.0
    %434 = vmatpush2.msra.mxu0 0.0
    %435 = vmatprep.subr.mxu0 0.0
    %436 = vmatpush2.msra.mxu0 0.0
    %437 = vmatprep.subr.mxu0 0.0
    %438 = vmatpush2.msra.mxu0 0.0
    %439 = vmatprep.subr.mxu0 0.0
    %440 = vmatpush2.msra.mxu0 0.0
    %441 = vmatprep.subr.mxu0 0.0
    %442 = vmatpush2.msra.mxu0 0.0
    %443 = vmatprep.subr.mxu0 0.0
    %444 = vmatpush2.msra.mxu0 0.0
    %445 = vmatprep.subr.mxu0 0.0
    %446 = vmatpush2.msra.mxu0 0.0
    %447 = vmatprep.mubr.f32.mxu0 0.0
    %448 = vmatmul.mubr.f32.gmra.mxu0 %v378
    %v449 = vpop.f32.mrf.mxu0
    %v450 = vadd.f32 %v369, %v449
    %v451 = vpop.f32.mrf.mxu0
    %452 = vmatprep.mubr.f32.mxu0 0.0
    %453 = vmatmul.mubr.f32.gmra.mxu0 %v381
    %v454 = vpop.f32.mrf.mxu0
    %v455 = vadd.f32 %v374, %v454
    %v456 = vpop.f32.mrf.mxu0
    %457 = vdwg.mxu0
    %v458 = vmul.f32 %v450, 0.01
    %v459 = vmul.f32 %v455, 0.01
    %v460 = vmax.f32 %v450, %v458
    %v461 = vmax.f32 %v455, %v459
    %v462 = vld [vmem:[%s7] sm:$0x1]
    %s463 = sld [smem:[#allocation2]]
    %v464 = vstv %s463
    %vm465 = vcmask 130048
    %v467 = vsel %vm465, %v462, 0
    %469 = vmatprep.subr.mxu0 0.0
    %470 = vmatpush1.msra.mxu0 0.0
    %471 = vmatprep.subr.mxu0 0.0
    %472 = vmatpush1.msra.mxu0 0.0
    %473 = vmatprep.subr.mxu0 0.0
    %474 = vmatpush1.msra.mxu0 0.0
    %475 = vmatprep.subr.mxu0 0.0
    %476 = vmatpush1.msra.mxu0 0.0
    %477 = vmatprep.subr.mxu0 0.0
    %478 = vmatpush1.msra.mxu0 0.0
    %479 = vmatprep.subr.mxu0 0.0
    %480 = vmatpush1.msra.mxu0 0.0
    %481 = vmatprep.subr.mxu0 0.0
    %482 = vmatpush1.msra.mxu0 0.0
    %483 = vmatprep.subr.mxu0 0.0
    %484 = vmatpush1.msra.mxu0 0.0
    %485 = vmatprep.subr.mxu0 0.0
    %486 = vmatpush1.msra.mxu0 0.0
    %487 = vmatprep.subr.mxu0 0.0
    %488 = vmatpush1.msra.mxu0 0.0
    %489 = vmatprep.subr.mxu0 0.0
    %490 = vmatpush1.msra.mxu0 0.0
    %491 = vmatprep.subr.mxu0 0.0
    %492 = vmatpush1.msra.mxu0 0.0
    %493 = vmatprep.subr.mxu0 0.0
    %494 = vmatpush1.msra.mxu0 0.0
    %495 = vmatprep.subr.mxu0 0.0
    %496 = vmatpush1.msra.mxu0 0.0
    %497 = vmatprep.subr.mxu0 0.0
    %498 = vmatpush1.msra.mxu0 %v461
    %499 = vmatprep.subr.mxu0 0.0
    %500 = vmatpush1.msra.mxu0 %v460
    %501 = vmatprep.subr.mxu0 0.0
    %502 = vmatpush2.msra.mxu0 0.0
    %503 = vmatprep.subr.mxu0 0.0
    %504 = vmatpush2.msra.mxu0 0.0
    %505 = vmatprep.subr.mxu0 0.0
    %506 = vmatpush2.msra.mxu0 0.0
    %507 = vmatprep.subr.mxu0 0.0
    %508 = vmatpush2.msra.mxu0 0.0
    %509 = vmatprep.subr.mxu0 0.0
    %510 = vmatpush2.msra.mxu0 0.0
    %511 = vmatprep.subr.mxu0 0.0
    %512 = vmatpush2.msra.mxu0 0.0
    %513 = vmatprep.subr.mxu0 0.0
    %514 = vmatpush2.msra.mxu0 0.0
    %515 = vmatprep.subr.mxu0 0.0
    %516 = vmatpush2.msra.mxu0 0.0
    %517 = vmatprep.subr.mxu0 0.0
    %518 = vmatpush2.msra.mxu0 0.0
    %519 = vmatprep.subr.mxu0 0.0
    %520 = vmatpush2.msra.mxu0 0.0
    %521 = vmatprep.subr.mxu0 0.0
    %522 = vmatpush2.msra.mxu0 0.0
    %523 = vmatprep.subr.mxu0 0.0
    %524 = vmatpush2.msra.mxu0 0.0
    %525 = vmatprep.subr.mxu0 0.0
    %526 = vmatpush2.msra.mxu0 0.0
    %527 = vmatprep.subr.mxu0 0.0
    %528 = vmatpush2.msra.mxu0 0.0
    %529 = vmatprep.subr.mxu0 0.0
    %530 = vmatpush2.msra.mxu0 0.0
    %531 = vmatprep.subr.mxu0 0.0
    %532 = vmatpush2.msra.mxu0 0.0
    %533 = vmatprep.mubr.f32.mxu0 0.0
    %534 = vmatmul.mubr.f32.gmra.mxu0 %v467
    %v535 = vpop.f32.mrf.mxu0
    %v536 = vadd.f32 %v464, %v535
    %v537 = vpop.f32.mrf.mxu0
    %538 = vdwg.mxu0
    %vm539 = vcmask 57344
    %540 = vst.msk [vmem:[#allocation3] sm:$0x1] %vm539, %v536
    // Predicated region
    $region38: #{tpu_custom_call.1} parent=1 // pred_check
      _
    $region39: #{tpu_custom_call.1} parent=1 // pred_check_branch
      %542 = sbr.rel (0) target = $region41
    $region40: #{tpu_custom_call.1} parent=1 // pred_region
      %s544 = ssub.s32 16, 16
      %545 = vsyncadd [#allocation4], %s544
      %s547 = sshll.u32 [#allocation3], 4
      %s548 = int_to_ptr.vmem [resolvable:$true] %s547
      %550 = dma.vmem_to_hbm [thread:$0]  %s548, 16, %s9, [#allocation4]
    $region41: #{tpu_custom_call.1} parent=1 // pred_fallthru
      _
    // Predicated region
    $region42: #{tpu_custom_call.1} parent=1 // pred_check
      _
    $region43: #{tpu_custom_call.1} parent=1 // pred_check_branch
      %552 = sbr.rel (0) target = $region45
    $region44: #{tpu_custom_call.1} parent=1 // pred_region
      %553 = dma.done [#allocation4], 16
    $region45: #{tpu_custom_call.1} parent=1 // pred_fallthru
      _
    %554 = vsyncpa [#allocation4], 1

</llo_original>
